<compile_context>
chip_gen: v6e
topology: v6e:2x2x1
jax: 0.10.0
libtpu: 0.0.40
codegen_flags: <defaults>
</compile_context>

<pallas_src>
import functools

import jax
import jax.numpy as jnp
from jax import lax
from jax.experimental import pallas as pl
from jax.experimental.pallas import tpu as pltpu


def _gumbel_argmax_kernel(u_ref, w_ref, out_ref, *, num_valid):
    # u_ref, w_ref : (1, Np) f32 in VMEM;  out_ref : (1,) int32 in SMEM.
    np_ = w_ref.shape[1]

    # Gumbel(0,1) noise from uniforms (clamp away from 0 so -log(-log(u)) is finite).
    u = jnp.maximum(u_ref[...], jnp.float32(1e-12))        # (1, Np), u in (0, 1)
    g = -jnp.log(-jnp.log(u))                               # EUP transcendentals

    # Scores: log-weight + Gumbel on valid lanes, -inf on padding.
    w = w_ref[...]                                           # zero-padded weights
    lane = lax.broadcasted_iota(jnp.int32, w.shape, 1)       # (1, Np) lane ids
    valid = lane < num_valid
    score = jnp.where(valid, jnp.log(w) + g, -jnp.inf)

    # argmax over the row: smallest lane attaining the max.
    m = jnp.max(score)
    cand = jnp.where(score == m, lane, jnp.int32(np_))
    idx = jnp.min(cand)

    # Defensive clamp (only matters in the all-zero-weights corner case, where
    # torch.multinomial would raise instead).
    out_ref[0] = jnp.minimum(idx, jnp.int32(num_valid - 1))


def _weighted_random_integer(w_pad, u_row, num_valid):
    """Sample one index ~ Categorical(weights / sum(weights)). Returns (1,) int32."""
    kernel = functools.partial(_gumbel_argmax_kernel, num_valid=num_valid)
    return pl.pallas_call(
        kernel,
        out_shape=jax.ShapeDtypeStruct((1,), jnp.int32),
        in_specs=[
            pl.BlockSpec(memory_space=pltpu.MemorySpace.VMEM),   # uniforms (1, Np)
            pl.BlockSpec(memory_space=pltpu.MemorySpace.VMEM),   # padded weights (1, Np)
        ],
        out_specs=pl.BlockSpec(memory_space=pltpu.MemorySpace.SMEM),
    )(u_row, w_pad)


class WeightedRandomIntegerJAX:
    """Mirror of the PyTorch module; weights initialized deterministically."""

    def __init__(self, num_weights, key):
        self.num_weights = num_weights
        # torch.rand -> U[0,1) weights
        self.weights = jax.random.uniform(key, (num_weights,), dtype=jnp.float32)
        # Pad once (perf: no per-call zeros+scatter).
        np_ = max(128, ((num_weights + 127) // 128) * 128)
        self._w_pad = (
            jnp.zeros((1, np_), jnp.float32).at[0, :num_weights].set(self.weights)
        )

    def forward(self, seed=0):
        # TODO(synk): torch.multinomial returns int64 and uses torch's Philox
        # stream; we return int32 and use jax.random-driven Gumbel noise, so
        # per-seed index parity with torch is not possible (distribution matches).
        key = jax.random.PRNGKey(seed)
        u_row = jax.random.uniform(key, self._w_pad.shape, dtype=jnp.float32)
        return _weighted_random_integer(self._w_pad, u_row, self.num_weights)


if __name__ == "__main__":
    key = jax.random.PRNGKey(0)
    num_weights = 37
    mod = WeightedRandomIntegerJAX(num_weights, key)

    idx = mod.forward(seed=1234)
    idx = jax.block_until_ready(idx)

    i = int(idx[0])
    assert idx.shape == (1,), f"bad shape {idx.shape}"
    assert 0 <= i < num_weights, f"sampled index {i} out of range"
    # sanity: sampled index must have nonzero weight
    assert float(mod.weights[i]) > 0.0

    # a couple more seeds to exercise the kernel
    for s in (0, 7, 99):
        j = int(jax.block_until_ready(mod.forward(seed=s))[0])
        assert 0 <= j < num_weights

    print("KERNEL_OK")
</pallas_src>

<mosaic_0001>
module attributes {stable_mosaic.version = 11 : i64} {
  func.func @_gumbel_argmax_kernel(%arg0: memref<1x128xf32, #tpu.memory_space<vmem>>, %arg1: memref<1x128xf32, #tpu.memory_space<vmem>>, %arg2: memref<1xi32, #tpu.memory_space<smem>>) attributes {dimension_semantics = [], scalar_prefetch = 0 : i64, scratch_operands = 0 : i64, tpu.core_type = #tpu.core_type<tc>} {
    %c0 = arith.constant 0 : index
    %c0_0 = arith.constant 0 : index
    %0 = vector.load %arg0[%c0, %c0_0] : memref<1x128xf32, #tpu.memory_space<vmem>>, vector<1x128xf32>
    %cst = arith.constant 9.99999996E-13 : f32
    %1 = vector.broadcast %cst : f32 to vector<1x128xf32>
    %2 = arith.maximumf %0, %1 : vector<1x128xf32>
    %3 = math.log %2 : vector<1x128xf32>
    %cst_1 = arith.constant 0.000000e+00 : f32
    %4 = vector.broadcast %cst_1 : f32 to vector<1x128xf32>
    %5 = arith.subf %4, %3 : vector<1x128xf32>
    %6 = math.log %5 : vector<1x128xf32>
    %cst_2 = arith.constant 0.000000e+00 : f32
    %7 = vector.broadcast %cst_2 : f32 to vector<1x128xf32>
    %8 = arith.subf %7, %6 : vector<1x128xf32>
    %c0_3 = arith.constant 0 : index
    %c0_4 = arith.constant 0 : index
    %9 = vector.load %arg1[%c0_3, %c0_4] : memref<1x128xf32, #tpu.memory_space<vmem>>, vector<1x128xf32>
    %10 = tpu.iota {dimensions = array<i32: 1>} : vector<1x128xi32>
    %c37_i32 = arith.constant 37 : i32
    %11 = vector.broadcast %c37_i32 : i32 to vector<1x128xi32>
    %12 = arith.cmpi slt, %10, %11 : vector<1x128xi32>
    %13 = math.log %9 : vector<1x128xf32>
    %14 = arith.addf %13, %8 : vector<1x128xf32>
    %cst_5 = arith.constant 0xFF800000 : f32
    %15 = vector.broadcast %cst_5 : f32 to vector<1x128xf32>
    %16 = arith.select %12, %14, %15 : vector<1x128xi1>, vector<1x128xf32>
    %17 = vector.shape_cast %16 : vector<1x128xf32> to vector<1x1x128xf32>
    %cst_6 = arith.constant dense<0xFF800000> : vector<1xf32>
    %18 = vector.multi_reduction <maximumf>, %17, %cst_6 [1, 2] : vector<1x1x128xf32> to vector<1xf32>
    %19 = vector.shape_cast %18 : vector<1xf32> to vector<1x1x1xf32>
    %20 = vector.extract %19[0, 0, 0] : f32 from vector<1x1x1xf32>
    %21 = vector.broadcast %20 : f32 to vector<1x128xf32>
    %22 = arith.cmpf oeq, %16, %21 : vector<1x128xf32>
    %c128_i32 = arith.constant 128 : i32
    %23 = vector.broadcast %c128_i32 : i32 to vector<1x128xi32>
    %24 = arith.select %22, %10, %23 : vector<1x128xi1>, vector<1x128xi32>
    %25 = vector.shape_cast %24 : vector<1x128xi32> to vector<1x1x128xi32>
    %cst_7 = arith.constant dense<2147483647> : vector<1xi32>
    %26 = vector.multi_reduction <minsi>, %25, %cst_7 [1, 2] : vector<1x1x128xi32> to vector<1xi32>
    %27 = vector.shape_cast %26 : vector<1xi32> to vector<1x1x1xi32>
    %28 = vector.extract %27[0, 0, 0] : i32 from vector<1x1x1xi32>
    %c36_i32 = arith.constant 36 : i32
    %29 = arith.minsi %28, %c36_i32 : i32
    %c0_8 = arith.constant 0 : index
    %30 = memref.load %arg2[%c0_8] : memref<1xi32, #tpu.memory_space<smem>>
    memref.store %29, %arg2[%c0_8] : memref<1xi32, #tpu.memory_space<smem>>
    return
  }
}

</mosaic_0001>

<llo_original>
// kernel: tpu_custom_call.1
$region0: #{tpu_custom_call.1}
  #allocation0 [shape = 'u32[]', space=smem, size = 0x4, offset = 0x4, fixed_abs, tag = 'smem constant byte address 0x4 - core index']
  #allocation1 [shape = 'u32[144,128]{1,0:T(1,128)}', space=vmem, size = 0x12000, scoped, tag = 'internal scratch']
  %s0 = inlined_call_operand.hbm [shape: f32[1,128], index: 0, kind: input, shape index: {}]
  %s1 = inlined_call_operand.vmem [shape: f32[1,128], index: 1, kind: input, shape index: {}]
  %s2 = inlined_call_operand.hbm [shape: s32[1], index: 2, kind: output, shape index: {}]
  %s3 = sld [smem:[#allocation0]]
  $region22: #{tpu_custom_call.1} parent=0
    _
  %s5 = ssub.s32 1, %s3
  %s6 = scalar_select 0, %s5, %s3
  $region1: #{tpu_custom_call.1} parent=0
    #allocation2 [shape = 'u8[512]{0}', space=vmem, size = 0x400, scoped, tag = 'input window, operand 0, single buffered']
    #allocation3 [shape = 's32[1]{0}', space=sflag, size = 0x4, scoped, tag = 'scoped memory for tpu_custom_call.1']
    #allocation4 [shape = 's32[1]{0}', space=sflag, size = 0x4, scoped, tag = 'scoped memory for tpu_custom_call.1']
    #allocation5 [shape = 'u8[512]{0}', space=smem, size = 0x200, scoped, tag = 'output window, operand 0, single buffered']
    %7 = vsyncpa [#allocation3], 0
    %8 = vsyncpa [#allocation4], 0
    // Predicated region
    $region2: #{tpu_custom_call.1} parent=1 // pred_check
      _
    $region3: #{tpu_custom_call.1} parent=1 // pred_check_branch
      %10 = sbr.rel (0) target = $region5
    $region4: #{tpu_custom_call.1} parent=1 // pred_region
      %s12 = ssub.s32 16, 16
      %13 = vsyncadd [#allocation3], %s12
      %s15 = sshll.u32 [#allocation2], 4
      %s16 = int_to_ptr.vmem [resolvable:$true] %s15
      %18 = dma.hbm_to_vmem [thread:$0]  %s0, 16, %s16, [#allocation3]
    $region5: #{tpu_custom_call.1} parent=1 // pred_fallthru
      _
    // Predicated region
    $region6: #{tpu_custom_call.1} parent=1 // pred_check
      _
    $region7: #{tpu_custom_call.1} parent=1 // pred_check_branch
      %20 = sbr.rel (0) target = $region9
    $region8: #{tpu_custom_call.1} parent=1 // pred_region
      _
    $region9: #{tpu_custom_call.1} parent=1 // pred_fallthru
      _
    // Predicated region
    $region10: #{tpu_custom_call.1} parent=1 // pred_check
      _
    $region11: #{tpu_custom_call.1} parent=1 // pred_check_branch
      %22 = sbr.rel (0) target = $region13
    $region12: #{tpu_custom_call.1} parent=1 // pred_region
      %23 = dma.done [#allocation3], 16
    $region13: #{tpu_custom_call.1} parent=1 // pred_fallthru
      _
    %v24 = vld [vmem:[#allocation2] sm:$0x1]
    %v25 = vmax.f32 %v24, 1e-12
    %v26 = vlog2.pop %v25
    %v27 = vmul.f32 %v26, 0.6931472
    %v28 = vsub.f32 0.0, %v27
    %v29 = vlog2.pop %v28
    %v30 = vmul.f32 %v29, 0.6931472
    %v31 = vsub.f32 0.0, %v30
    %v32 = vld [vmem:[%s1] sm:$0x1]
    %v33 = vlaneseq
    %v34 = vand.u32 %v33, 127
    %vm35 = vcmp.lt.s32.totalorder %v34, 37
    %v36 = vlog2.pop %v32
    %v37 = vmul.f32 %v36, 0.6931472
    %v38 = vadd.f32 %v37, %v31
    %v39 = vsel %vm35, %v38, -inf
    %vm40 = vcmask 1040384
    %v41 = vsel %vm40, %v39, -inf
    %42 = vmax.xlane.f32.xlu0 %v41
    %v43 = vpop.xlane.xlu0 %42
    %v44 = vrot.slane %v43, 4
    %v45 = vmax.f32 %v43, %v44
    %v46 = vrot.slane %v45, 2
    %v47 = vmax.f32 %v45, %v46
    %v48 = vrot.slane %v47, 1
    %v49 = vmax.f32 %v47, %v48
    %s50 = vtos %v49
    %v51 = vstv %s50
    %vm52 = vcmp.eq.f32.partialorder %v39, %v51
    %v53 = vsel %vm52, %v34, 128
    %v54 = vsel %vm40, %v53, 2147483647
    %v55 = vand.u32 %v54, 65535
    %v56 = vshra.s32 %v54, 16
    %v57 = vcvt.s32.f32 %v55
    %v58 = vcvt.s32.f32 %v56
    %59 = vmin.xlane.f32.xlu0 %v58
    %v60 = vpop.xlane.xlu0 %59
    %vm61 = vcmp.eq.f32.partialorder %v58, %v60
    %v62 = vsel %vm61, %v57, inf
    %63 = vmin.xlane.f32.xlu0 %v62
    %v64 = vpop.xlane.xlu0 %63
    %v65 = vcvt.f32.s32 %v64
    %v66 = vcvt.f32.s32 %v60
    %v67 = vshll.u32 %v66, 16
    %v68 = vadd.s32 %v67, %v65
    %v69 = vrot.slane %v68, 4
    %vm70 = vcmp.lt.s32.totalorder %v68, %v69
    %v71 = vsel %vm70, %v68, %v69
    %v72 = vrot.slane %v71, 2
    %vm73 = vcmp.lt.s32.totalorder %v71, %v72
    %v74 = vsel %vm73, %v71, %v72
    %v75 = vrot.slane %v74, 1
    %vm76 = vcmp.lt.s32.totalorder %v74, %v75
    %v77 = vsel %vm76, %v74, %v75
    %s78 = vtos %v77
    %p79 = scmp.lt.s32.totalorder %s78, 36
    %s80 = scalar_select %p79, %s78, 36
    %s81 = scalar_lea.smem [#allocation5], 0
    %82 = sst [smem:[%s81]] %s80
    // Predicated region
    $region14: #{tpu_custom_call.1} parent=1 // pred_check
      _
    $region15: #{tpu_custom_call.1} parent=1 // pred_check_branch
      %84 = sbr.rel (0) target = $region17
    $region16: #{tpu_custom_call.1} parent=1 // pred_region
      %s86 = ssub.s32 16, 16
      %87 = vsyncadd [#allocation4], %s86
      %90 = dma.smem_to_hbm [#allocation5], 16, %s2, [#allocation4]
    $region17: #{tpu_custom_call.1} parent=1 // pred_fallthru
      _
    // Predicated region
    $region18: #{tpu_custom_call.1} parent=1 // pred_check
      _
    $region19: #{tpu_custom_call.1} parent=1 // pred_check_branch
      %92 = sbr.rel (0) target = $region21
    $region20: #{tpu_custom_call.1} parent=1 // pred_region
      %93 = dma.done [#allocation4], 16
    $region21: #{tpu_custom_call.1} parent=1 // pred_fallthru
      _
    %94 = sfence
    %95 = vsyncpa [#allocation3], 1
    %96 = vsyncpa [#allocation4], 1

</llo_original>
